<compile_context>
chip_gen: v7x
topology: tpu7x:2x2x1
jax: 0.10.0
libtpu: 0.0.40
codegen_flags: <defaults>
</compile_context>

<pallas_src>
import functools

import jax
import jax.numpy as jnp
from jax import lax
from jax.experimental import pallas as pl
from jax.experimental.pallas import tpu as pltpu

_LANES = 128
_MAX_BLOCK_ROWS = 1024  # 1024 x 128 x 4B = 512 KiB per f32 block (double-buffered)


def _hash_u32(x):
    """lowbias32: bijective, well-mixed uint32 -> uint32 hash (VPU-only ops)."""
    x = x ^ (x >> jnp.uint32(16))
    x = x * jnp.uint32(0x7FEB352D)
    x = x ^ (x >> jnp.uint32(15))
    x = x * jnp.uint32(0x846CA68B)
    x = x ^ (x >> jnp.uint32(16))
    return x


def _bits_to_unit(bits):
    """uint32 random bits -> float32 uniform in [0, 1) via the mantissa trick."""
    m = (bits >> jnp.uint32(9)) | jnp.uint32(0x3F800000)  # bit pattern of [1.0, 2.0)
    return lax.bitcast_convert_type(m, jnp.float32) - jnp.float32(1.0)


def _gaussian_noise_kernel(seed_ref, x_ref, o_ref, *, stddev):
    """out = x + stddev * N(0, 1) on one (block_rows, 128) tile.

    seed_ref : SMEM int32[1]          -- base seed
    x_ref    : VMEM dtype[BR, 128]    -- input tile (native dtype)
    o_ref    : VMEM dtype[BR, 128]    -- output tile (native dtype)
    """
    rows, lanes = x_ref.shape
    half = rows // 2  # one uniform pair -> two Gaussians (top/bottom half rows)

    # Globally unique per-pair counters: distinct across lanes, rows, grid
    # steps (and therefore across v7x cores running different grid steps).
    row = lax.broadcasted_iota(jnp.int32, (half, lanes), 0)
    col = lax.broadcasted_iota(jnp.int32, (half, lanes), 1)
    base = pl.program_id(0) * (half * lanes)
    idx = (base + row * lanes + col).astype(jnp.uint32)

    key = seed_ref[0].astype(jnp.uint32) * jnp.uint32(0x9E3779B9)
    b1 = _hash_u32(idx ^ key)                         # stream 1
    b2 = _hash_u32(b1 ^ jnp.uint32(0x85EBCA6B))       # stream 2 (chained hash)

    u1 = _bits_to_unit(b1)                            # [0, 1)
    u2 = _bits_to_unit(b2)                            # [0, 1)

    # Box-Muller, both outputs used -> halves log/sqrt/trig work on the EUP.
    r = jnp.sqrt(jnp.float32(-2.0) * jnp.log(jnp.float32(1.0) - u1))  # 1-u1 in (0,1]
    theta = jnp.float32(2.0 * jnp.pi) * u2
    z0 = r * jnp.cos(theta)
    z1 = r * jnp.sin(theta)

    s = jnp.float32(stddev)
    o_ref[:half, :] = (x_ref[:half, :].astype(jnp.float32) + z0 * s).astype(o_ref.dtype)
    o_ref[half:, :] = (x_ref[half:, :].astype(jnp.float32) + z1 * s).astype(o_ref.dtype)


def gaussian_noise(x, *, stddev, seed=0, training=True):
    """Pallas equivalent of GaussianNoise.forward."""
    if not training:
        return x

    orig_shape = x.shape
    dtype = x.dtype
    n = x.size

    xf = x.reshape(-1)  # keep native dtype: no wrapper-side f32 round-trip
    # Pad the flat length to a whole number of (8, 128) vreg tiles so the row
    # count is sublane-aligned and even.  Only triggers when n % 1024 != 0.
    # TODO(synk): mask the ragged tail in-kernel instead of the pad/slice pass.
    pad = (-n) % (8 * _LANES)
    if pad:
        xf = jnp.pad(xf, (0, pad))
    x2 = xf.reshape(-1, _LANES)
    rows = x2.shape[0]  # multiple of 8 (hence even)

    block_rows = min(_MAX_BLOCK_ROWS, rows)
    grid = (pl.cdiv(rows, block_rows),)

    seed_arr = jnp.asarray([seed], dtype=jnp.int32)

    out2 = pl.pallas_call(
        functools.partial(_gaussian_noise_kernel, stddev=float(stddev)),
        out_shape=jax.ShapeDtypeStruct(x2.shape, dtype),
        grid=grid,
        in_specs=[
            pl.BlockSpec(memory_space=pltpu.MemorySpace.SMEM),     # seed scalar
            pl.BlockSpec((block_rows, _LANES), lambda i: (i, 0)),  # x tile
        ],
        out_specs=pl.BlockSpec((block_rows, _LANES), lambda i: (i, 0)),
        compiler_params=pltpu.CompilerParams(
            # Independent tiles -> shard across v7x's two TensorCores.
            dimension_semantics=("parallel",),
            # Small double-buffered tiles; 32 MiB is safe on v5e/v6e/v7x.
            vmem_limit_bytes=32 * 1024 * 1024,
        ),
    )(seed_arr, x2)

    out = out2.reshape(-1)
    if pad:
        out = out[:n]
    return out.reshape(orig_shape)


if __name__ == "__main__":
    key = jax.random.PRNGKey(0)
    # NCHW input, matching the PyTorch module's typical usage.
    x = jax.random.normal(key, (2, 4, 16, 16), dtype=jnp.float32)
    stddev = 0.1

    # Training mode: noise added inside the Pallas kernel.
    y = gaussian_noise(x, stddev=stddev, seed=1234, training=True)
    y = jax.block_until_ready(y)
    assert y.shape == x.shape and y.dtype == x.dtype

    noise = y - x
    noise_std = float(jnp.std(noise))
    noise_mean = float(jnp.mean(noise))
    assert 0.06 < noise_std < 0.15, f"unexpected noise std {noise_std}"
    assert abs(noise_mean) < 0.03, f"unexpected noise mean {noise_mean}"

    # Native-dtype path: bf16 in / bf16 out without wrapper-side upcasts.
    x_bf = x.astype(jnp.bfloat16)
    y_bf = jax.block_until_ready(
        gaussian_noise(x_bf, stddev=stddev, seed=7, training=True))
    assert y_bf.shape == x_bf.shape and y_bf.dtype == jnp.bfloat16
    noise_bf = y_bf.astype(jnp.float32) - x_bf.astype(jnp.float32)
    assert bool(jnp.all(jnp.isfinite(noise_bf)))
    assert 0.05 < float(jnp.std(noise_bf)) < 0.2

    # Eval mode: identity.
    y_eval = jax.block_until_ready(gaussian_noise(x, stddev=stddev, training=False))
    assert bool(jnp.all(y_eval == x))

    print("KERNEL_OK")
</pallas_src>

<mosaic_0001>
module attributes {stable_mosaic.version = 11 : i64} {
  func.func @_gaussian_noise_kernel(%arg0: i32, %arg1: memref<1xi32, #tpu.memory_space<smem>>, %arg2: memref<16x128xf32, #tpu.memory_space<vmem>>, %arg3: memref<16x128xf32, #tpu.memory_space<vmem>>) attributes {dimension_semantics = [#tpu.dimension_semantics<parallel>], iteration_bounds = array<i64: 1>, scalar_prefetch = 0 : i64, scratch_operands = 0 : i64, tpu.core_type = #tpu.core_type<tc>, window_params = [{transform_indices = @transform_0, window_bounds = array<i64: 1>}, {transform_indices = @transform_1, window_bounds = array<i64: 16, 128>}, {transform_indices = @transform_2, window_bounds = array<i64: 16, 128>}]} {
    %0 = tpu.iota {dimensions = array<i32: 0>} : vector<8x128xi32>
    %1 = tpu.iota {dimensions = array<i32: 1>} : vector<8x128xi32>
    %c1024_i32 = arith.constant 1024 : i32
    %2 = arith.muli %arg0, %c1024_i32 : i32
    %c128_i32 = arith.constant 128 : i32
    %3 = vector.broadcast %c128_i32 : i32 to vector<8x128xi32>
    %4 = arith.muli %0, %3 : vector<8x128xi32>
    %5 = vector.broadcast %2 : i32 to vector<8x128xi32>
    %6 = arith.addi %5, %4 : vector<8x128xi32>
    %7 = arith.addi %6, %1 : vector<8x128xi32>
    %c0 = arith.constant 0 : index
    %8 = memref.load %arg1[%c0] : memref<1xi32, #tpu.memory_space<smem>>
    %c-1640531527_i32 = arith.constant -1640531527 : i32
    %9 = arith.muli %8, %c-1640531527_i32 : i32
    %10 = vector.broadcast %9 : i32 to vector<8x128xi32>
    %11 = arith.xori %7, %10 : vector<8x128xi32>
    %c16_i32 = arith.constant 16 : i32
    %12 = vector.broadcast %c16_i32 : i32 to vector<8x128xi32>
    %13 = arith.shrui %11, %12 : vector<8x128xi32>
    %14 = arith.xori %11, %13 : vector<8x128xi32>
    %c2146121005_i32 = arith.constant 2146121005 : i32
    %15 = vector.broadcast %c2146121005_i32 : i32 to vector<8x128xi32>
    %16 = arith.muli %14, %15 : vector<8x128xi32>
    %c15_i32 = arith.constant 15 : i32
    %17 = vector.broadcast %c15_i32 : i32 to vector<8x128xi32>
    %18 = arith.shrui %16, %17 : vector<8x128xi32>
    %19 = arith.xori %16, %18 : vector<8x128xi32>
    %c-2073254261_i32 = arith.constant -2073254261 : i32
    %20 = vector.broadcast %c-2073254261_i32 : i32 to vector<8x128xi32>
    %21 = arith.muli %19, %20 : vector<8x128xi32>
    %c16_i32_0 = arith.constant 16 : i32
    %22 = vector.broadcast %c16_i32_0 : i32 to vector<8x128xi32>
    %23 = arith.shrui %21, %22 : vector<8x128xi32>
    %24 = arith.xori %21, %23 : vector<8x128xi32>
    %c-2048144789_i32 = arith.constant -2048144789 : i32
    %25 = vector.broadcast %c-2048144789_i32 : i32 to vector<8x128xi32>
    %26 = arith.xori %24, %25 : vector<8x128xi32>
    %c16_i32_1 = arith.constant 16 : i32
    %27 = vector.broadcast %c16_i32_1 : i32 to vector<8x128xi32>
    %28 = arith.shrui %26, %27 : vector<8x128xi32>
    %29 = arith.xori %26, %28 : vector<8x128xi32>
    %c2146121005_i32_2 = arith.constant 2146121005 : i32
    %30 = vector.broadcast %c2146121005_i32_2 : i32 to vector<8x128xi32>
    %31 = arith.muli %29, %30 : vector<8x128xi32>
    %c15_i32_3 = arith.constant 15 : i32
    %32 = vector.broadcast %c15_i32_3 : i32 to vector<8x128xi32>
    %33 = arith.shrui %31, %32 : vector<8x128xi32>
    %34 = arith.xori %31, %33 : vector<8x128xi32>
    %c-2073254261_i32_4 = arith.constant -2073254261 : i32
    %35 = vector.broadcast %c-2073254261_i32_4 : i32 to vector<8x128xi32>
    %36 = arith.muli %34, %35 : vector<8x128xi32>
    %c16_i32_5 = arith.constant 16 : i32
    %37 = vector.broadcast %c16_i32_5 : i32 to vector<8x128xi32>
    %38 = arith.shrui %36, %37 : vector<8x128xi32>
    %39 = arith.xori %36, %38 : vector<8x128xi32>
    %c9_i32 = arith.constant 9 : i32
    %40 = vector.broadcast %c9_i32 : i32 to vector<8x128xi32>
    %41 = arith.shrui %24, %40 : vector<8x128xi32>
    %c1065353216_i32 = arith.constant 1065353216 : i32
    %42 = vector.broadcast %c1065353216_i32 : i32 to vector<8x128xi32>
    %43 = arith.ori %41, %42 : vector<8x128xi32>
    %44 = tpu.bitcast %43 : vector<8x128xi32> -> vector<8x128xf32>
    %cst = arith.constant 1.000000e+00 : f32
    %45 = vector.broadcast %cst : f32 to vector<8x128xf32>
    %46 = arith.subf %44, %45 : vector<8x128xf32>
    %c9_i32_6 = arith.constant 9 : i32
    %47 = vector.broadcast %c9_i32_6 : i32 to vector<8x128xi32>
    %48 = arith.shrui %39, %47 : vector<8x128xi32>
    %c1065353216_i32_7 = arith.constant 1065353216 : i32
    %49 = vector.broadcast %c1065353216_i32_7 : i32 to vector<8x128xi32>
    %50 = arith.ori %48, %49 : vector<8x128xi32>
    %51 = tpu.bitcast %50 : vector<8x128xi32> -> vector<8x128xf32>
    %cst_8 = arith.constant 1.000000e+00 : f32
    %52 = vector.broadcast %cst_8 : f32 to vector<8x128xf32>
    %53 = arith.subf %51, %52 : vector<8x128xf32>
    %cst_9 = arith.constant 1.000000e+00 : f32
    %54 = vector.broadcast %cst_9 : f32 to vector<8x128xf32>
    %55 = arith.subf %54, %46 : vector<8x128xf32>
    %56 = math.log %55 : vector<8x128xf32>
    %cst_10 = arith.constant -2.000000e+00 : f32
    %57 = vector.broadcast %cst_10 : f32 to vector<8x128xf32>
    %58 = arith.mulf %57, %56 : vector<8x128xf32>
    %59 = math.sqrt %58 : vector<8x128xf32>
    %cst_11 = arith.constant 6.28318548 : f32
    %60 = vector.broadcast %cst_11 : f32 to vector<8x128xf32>
    %61 = arith.mulf %60, %53 : vector<8x128xf32>
    %62 = math.cos %61 : vector<8x128xf32>
    %63 = arith.mulf %59, %62 : vector<8x128xf32>
    %64 = math.sin %61 : vector<8x128xf32>
    %65 = arith.mulf %59, %64 : vector<8x128xf32>
    %c0_12 = arith.constant 0 : index
    %c0_13 = arith.constant 0 : index
    %66 = vector.load %arg2[%c0_12, %c0_13] : memref<16x128xf32, #tpu.memory_space<vmem>>, vector<8x128xf32>
    %cst_14 = arith.constant 1.000000e-01 : f32
    %67 = vector.broadcast %cst_14 : f32 to vector<8x128xf32>
    %68 = arith.mulf %63, %67 : vector<8x128xf32>
    %69 = arith.addf %66, %68 : vector<8x128xf32>
    %c0_15 = arith.constant 0 : index
    %c0_16 = arith.constant 0 : index
    %70 = vector.load %arg3[%c0_15, %c0_16] : memref<16x128xf32, #tpu.memory_space<vmem>>, vector<8x128xf32>
    tpu.vector_store %arg3[%c0_15, %c0_16], %69 {strides = array<i32>} : memref<16x128xf32, #tpu.memory_space<vmem>>, vector<8x128xf32>,
    %c8 = arith.constant 8 : index
    %c0_17 = arith.constant 0 : index
    %71 = vector.load %arg2[%c8, %c0_17] : memref<16x128xf32, #tpu.memory_space<vmem>>, vector<8x128xf32>
    %cst_18 = arith.constant 1.000000e-01 : f32
    %72 = vector.broadcast %cst_18 : f32 to vector<8x128xf32>
    %73 = arith.mulf %65, %72 : vector<8x128xf32>
    %74 = arith.addf %71, %73 : vector<8x128xf32>
    %c8_19 = arith.constant 8 : index
    %c0_20 = arith.constant 0 : index
    %75 = vector.load %arg3[%c8_19, %c0_20] : memref<16x128xf32, #tpu.memory_space<vmem>>, vector<8x128xf32>
    tpu.vector_store %arg3[%c8_19, %c0_20], %74 {strides = array<i32>} : memref<16x128xf32, #tpu.memory_space<vmem>>, vector<8x128xf32>,
    return
  }
  func.func @transform_0(%arg0: i32) -> i32 {
    %c0_i32 = arith.constant 0 : i32
    %c0_i32_0 = arith.constant 0 : i32
    return %c0_i32 : i32
  }
  func.func @transform_1(%arg0: i32) -> (i32, i32) {
    %c0_i32 = arith.constant 0 : i32
    %c0_i32_0 = arith.constant 0 : i32
    return %arg0, %c0_i32 : i32, i32
  }
  func.func @transform_2(%arg0: i32) -> (i32, i32) {
    %c0_i32 = arith.constant 0 : i32
    %c0_i32_0 = arith.constant 0 : i32
    return %arg0, %c0_i32 : i32, i32
  }
}

</mosaic_0001>

<llo_original>
// kernel: tpu_custom_call.1
$region0: #{tpu_custom_call.1}
  #allocation0 [shape = 'u32[]', space=smem, size = 0x4, offset = 0x4, fixed_abs, tag = 'smem constant byte address 0x4 - core index']
  #allocation1 [shape = 'u32[144,128]{1,0:T(1,128)}', space=vmem, size = 0x12000, scoped, tag = 'internal scratch']
  #allocation2 [shape = 's32[1]{0:T(128)S(6)}', space=smem, size = 0x200, scoped, tag = 'scoped memory for tpu_custom_call.1']
  %s0 = inlined_call_operand.<no memory space> [shape: s32[1], index: 0, kind: input, shape index: {}]
  %s1 = inlined_call_operand.hbm [shape: f32[16,128], index: 1, kind: input, shape index: {}]
  %s2 = inlined_call_operand.hbm [shape: f32[16,128], index: 2, kind: output, shape index: {}]
  %s3 = sld [smem:[#allocation0]]
  $region22: #{tpu_custom_call.1} parent=0
    _
  %s5 = ssub.s32 1, %s3
  %s6 = scalar_select 0, %s5, %s3
  %7 = sst [smem:[#allocation2]] %s0
  $region1: #{tpu_custom_call.1} parent=0
    #allocation3 [shape = 'u8[8192]{0}', space=vmem, size = 0x2000, scoped, tag = 'input window, operand 1, single buffered']
    #allocation4 [shape = 's32[1]{0}', space=sflag, size = 0x4, scoped, tag = 'scoped memory for tpu_custom_call.1']
    #allocation5 [shape = 's32[1]{0}', space=sflag, size = 0x4, scoped, tag = 'scoped memory for tpu_custom_call.1']
    #allocation6 [shape = 'u8[8192]{0}', space=vmem, size = 0x2000, scoped, tag = 'output window, operand 0, single buffered']
    %8 = vsyncpa [#allocation4], 0
    %9 = vsyncpa [#allocation5], 0
    // Predicated region
    $region2: #{tpu_custom_call.1} parent=1 // pred_check
      _
    $region3: #{tpu_custom_call.1} parent=1 // pred_check_branch
      %11 = sbr.rel (0) target = $region5
    $region4: #{tpu_custom_call.1} parent=1 // pred_region
      _
    $region5: #{tpu_custom_call.1} parent=1 // pred_fallthru
      _
    // Predicated region
    $region6: #{tpu_custom_call.1} parent=1 // pred_check
      _
    $region7: #{tpu_custom_call.1} parent=1 // pred_check_branch
      %13 = sbr.rel (0) target = $region9
    $region8: #{tpu_custom_call.1} parent=1 // pred_region
      %s15 = ssub.s32 256, 256
      %16 = vsyncadd [#allocation4], %s15
      %s17 = sshll.u32 [#allocation3], 4
      %s18 = int_to_ptr.vmem [resolvable:$true] %s17
      %23 = dma.hbm_to_vmem [thread:$0]  %s1, 256, %s18, [#allocation4], 128, 128, 8
    $region9: #{tpu_custom_call.1} parent=1 // pred_fallthru
      _
    // Predicated region
    $region10: #{tpu_custom_call.1} parent=1 // pred_check
      _
    $region11: #{tpu_custom_call.1} parent=1 // pred_check_branch
      %25 = sbr.rel (0) target = $region13
    $region12: #{tpu_custom_call.1} parent=1 // pred_region
      %26 = dma.done [#allocation4], 256
    $region13: #{tpu_custom_call.1} parent=1 // pred_fallthru
      _
    %v27 = vlaneseq
    %v28 = vshrl.u32 %v27, 7
    %v29 = vlaneseq
    %v30 = vand.u32 %v29, 127
    %s31 = smul.u32 0, 1024
    %v32 = vmul.u32 %v28, 128
    %v33 = vstv %s31
    %v34 = vadd.s32 %v33, %v32
    %v35 = vadd.s32 %v34, %v30
    %s36 = sld [smem:[#allocation2]]
    %s37 = smul.u32 %s36, 2654435769
    %v38 = vstv %s37
    %v39 = vxor.u32 %v35, %v38
    %v40 = vshrl.u32 %v39, 16
    %v41 = vxor.u32 %v39, %v40
    %v42 = vmul.u32 %v41, 2146121005
    %v43 = vshrl.u32 %v42, 15
    %v44 = vxor.u32 %v42, %v43
    %v45 = vmul.u32 %v44, 2221713035
    %v46 = vshrl.u32 %v45, 16
    %v47 = vxor.u32 %v45, %v46
    %v48 = vxor.u32 %v47, 2246822507
    %v49 = vshrl.u32 %v48, 16
    %v50 = vxor.u32 %v48, %v49
    %v51 = vmul.u32 %v50, 2146121005
    %v52 = vshrl.u32 %v51, 15
    %v53 = vxor.u32 %v51, %v52
    %v54 = vmul.u32 %v53, 2221713035
    %v55 = vshrl.u32 %v54, 16
    %v56 = vxor.u32 %v54, %v55
    %v57 = vshrl.u32 %v47, 9
    %v58 = vor.u32 %v57, 1065353216
    %v60 = vsub.f32 %v58, 1.0
    %v61 = vshrl.u32 %v56, 9
    %v62 = vor.u32 %v61, 1065353216
    %v64 = vsub.f32 %v62, 1.0
    %v65 = vsub.f32 1.0, %v60
    %v66 = vlog2.pop %v65
    %v67 = vmul.f32 %v66, 0.6931472
    %v68 = vmul.f32 %v67, -2.0
    %v69 = vrsqrt.pop %v68
    %v70 = vmul.f32 %v68, %v69
    %vm71 = vcmp.eq.f32.partialorder %v68, inf
    %v72 = vsel %vm71, %v68, %v70
    %vm73 = vcmp.eq.f32.partialorder %v68, 0.0
    %v74 = vand.u32 %v68, 2147483648
    %v75 = vsel %vm73, %v74, %v72
    %v76 = vmul.f32 %v64, 6.2831855
    %v77 = vand.u32 2147483647, %v76
    %vm78 = vcmp.le.f32.partialorder %v77, 0.7853982
    %vm79 = vcmp.lt.s32.totalorder %v76, 0
    %v80 = vand.u32 %v76, 2139095040
    %v81 = vshrl.u32 %v80, 23
    %v82 = vsub.s32 %v81, 127
    %v83 = vand.u32 2147483647, %v76
    %v84 = vand.u32 %v83, 8388607
    %v85 = vor.u32 %v84, 8388608
    %v86 = vsub.s32 0, %v85
    %v87 = vadd.s32 %v82, 1
    %vm88 = vcmp.gt.s32.totalorder %v87, 0
    %v89 = vsel %vm88, %v87, 0
    %v90 = vshrl.u32 %v89, 5
    %v91 = vand.u32 %v89, 31
    %v92 = vsub.s32 32, %v91
    %v93 = vshrl.u32 683565275, %v92
    %v94 = vshll.u32 683565275, %v91
    %v95 = vshrl.u32 2475754826, %v92
    %v96 = vor.u32 %v94, %v95
    %v97 = vshll.u32 2475754826, %v91
    %v98 = vshrl.u32 2131351028, %v92
    %v99 = vor.u32 %v97, %v98
    %v100 = vshll.u32 2131351028, %v91
    %v101 = vshrl.u32 2102212464, %v92
    %v102 = vor.u32 %v100, %v101
    %v103 = vshll.u32 2102212464, %v91
    %v104 = vshrl.u32 920167782, %v92
    %v105 = vor.u32 %v103, %v104
    %v106 = vshll.u32 920167782, %v91
    %v107 = vshrl.u32 1326507024, %v92
    %v108 = vor.u32 %v106, %v107
    %vm109 = vcmp.lt.s32.totalorder %v90, 1
    %vm110 = vcmp.lt.s32.totalorder %v90, 2
    %vm111 = vcmp.lt.s32.totalorder %v90, 3
    %vm112 = vcmp.lt.s32.totalorder %v90, 4
    %v113 = vsel %vm109, %v93, %v96
    %v114 = vsel %vm112, %v102, 2102212464
    %v115 = vsel %vm111, %v99, %v114
    %v116 = vsel %vm110, %v113, %v115
    %v117 = vsel %vm109, %v96, %v99
    %v118 = vsel %vm112, %v105, 920167782
    %v119 = vsel %vm111, %v102, %v118
    %v120 = vsel %vm110, %v117, %v119
    %v121 = vsel %vm109, %v99, %v102
    %v122 = vsel %vm112, %v108, 1326507024
    %v123 = vsel %vm111, %v105, %v122
    %v124 = vsel %vm110, %v121, %v123
    %v125 = vshll.u32 %v85, 8
    %v126 = vmul.u32.u64.compose %v125, %v124
    %v127 = vextract.low.u32 %v126
    %v128 = vextract.high.u32 %v126
    %v129 = vmul.u32.u64.compose %v125, %v120
    %v130 = vextract.low.u32 %v129
    %v131 = vextract.high.u32 %v129
    %v132 = vmul.u32 %v125, %v116
    %v133 = vadd.s32 %v128, %v130
    %vm134 = vc.u32 %v128, %v130
    %v135 = vadd.s32 %v131, 1
    %v136 = vsel %vm134, %v135, %v131
    %v137 = vadd.s32 %v132, %v136
    %v138 = vadd.s32 %v137, 536870912
    %v139 = vshrl.u32 %v138, 30
    %v140 = vshll.u32 %v139, 30
    %v141 = vsub.s32 %v137, %v140
    %vm142 = vcmp.lt.s32.totalorder %v141, 0
    %v143 = vsub.s32 0, %v141
    %v144 = vsel %vm142, %v143, %v141
    %v145 = vclz %v144
    %v146 = vsub.s32 %v145, 2
    %vm147 = vcmp.gt.s32.totalorder 0, %v146
    %v148 = vsel %vm147, 0, %v146
    %v149 = vsub.s32 32, %v148
    %v150 = vshll.u32 %v141, %v148
    %v151 = vshrl.u32 %v133, %v149
    %v152 = vor.u32 %v150, %v151
    %v153 = vsub.s32 4294967266, %v148
    %v154 = vadd.s32 %v153, 127
    %v155 = vshll.u32 %v154, 23
    %v156 = vor.u32 4788187, %v155
    %v157 = vand.u32 2147483647, %v156
    %v159 = vcvt.s32.f32 %v152
    %v160 = vmul.f32 %v159, %v157
    %v161 = vxor.u32 %v160, 2147483648
    %v162 = vsel %vm79, %v161, %v160
    %v163 = vsub.s32 4, %v139
    %v164 = vsel %vm79, %v163, %v139
    %v165 = vsel %vm78, %v76, %v162
    %v166 = vsel %vm78, 0, %v164
    %v167 = vcosq.f32.pop %v165
    %v168 = vsinq.f32.pop %v165
    %vm169 = vweird.f32 %v76
    %v170 = vand.u32 %v166, 3
    %vm171 = vcmp.lt.s32.totalorder %v170, 2
    %vm172 = vcmp.eq.s32.totalorder %v170, 0
    %v173 = vxor.u32 %v168, 2147483648
    %v174 = vsel %vm172, %v167, %v173
    %vm175 = vcmp.eq.s32.totalorder %v170, 2
    %v176 = vxor.u32 %v167, 2147483648
    %v177 = vsel %vm175, %v176, %v168
    %v178 = vsel %vm171, %v174, %v177
    %v179 = vsel %vm169, nan, %v178
    %v180 = vmul.f32 %v75, %v179
    %v181 = vand.u32 2147483647, %v76
    %vm182 = vcmp.le.f32.partialorder %v181, 0.7853982
    %vm183 = vcmp.lt.s32.totalorder %v76, 0
    %v184 = vand.u32 %v76, 2139095040
    %v185 = vshrl.u32 %v184, 23
    %v186 = vsub.s32 %v185, 127
    %v187 = vand.u32 2147483647, %v76
    %v188 = vand.u32 %v187, 8388607
    %v189 = vor.u32 %v188, 8388608
    %v190 = vsub.s32 0, %v189
    %v191 = vadd.s32 %v186, 1
    %vm192 = vcmp.gt.s32.totalorder %v191, 0
    %v193 = vsel %vm192, %v191, 0
    %v194 = vshrl.u32 %v193, 5
    %v195 = vand.u32 %v193, 31
    %v196 = vsub.s32 32, %v195
    %v197 = vshrl.u32 683565275, %v196
    %v198 = vshll.u32 683565275, %v195
    %v199 = vshrl.u32 2475754826, %v196
    %v200 = vor.u32 %v198, %v199
    %v201 = vshll.u32 2475754826, %v195
    %v202 = vshrl.u32 2131351028, %v196
    %v203 = vor.u32 %v201, %v202
    %v204 = vshll.u32 2131351028, %v195
    %v205 = vshrl.u32 2102212464, %v196
    %v206 = vor.u32 %v204, %v205
    %v207 = vshll.u32 2102212464, %v195
    %v208 = vshrl.u32 920167782, %v196
    %v209 = vor.u32 %v207, %v208
    %v210 = vshll.u32 920167782, %v195
    %v211 = vshrl.u32 1326507024, %v196
    %v212 = vor.u32 %v210, %v211
    %vm213 = vcmp.lt.s32.totalorder %v194, 1
    %vm214 = vcmp.lt.s32.totalorder %v194, 2
    %vm215 = vcmp.lt.s32.totalorder %v194, 3
    %vm216 = vcmp.lt.s32.totalorder %v194, 4
    %v217 = vsel %vm213, %v197, %v200
    %v218 = vsel %vm216, %v206, 2102212464
    %v219 = vsel %vm215, %v203, %v218
    %v220 = vsel %vm214, %v217, %v219
    %v221 = vsel %vm213, %v200, %v203
    %v222 = vsel %vm216, %v209, 920167782
    %v223 = vsel %vm215, %v206, %v222
    %v224 = vsel %vm214, %v221, %v223
    %v225 = vsel %vm213, %v203, %v206
    %v226 = vsel %vm216, %v212, 1326507024
    %v227 = vsel %vm215, %v209, %v226
    %v228 = vsel %vm214, %v225, %v227
    %v229 = vshll.u32 %v189, 8
    %v230 = vmul.u32.u64.compose %v229, %v228
    %v231 = vextract.low.u32 %v230
    %v232 = vextract.high.u32 %v230
    %v233 = vmul.u32.u64.compose %v229, %v224
    %v234 = vextract.low.u32 %v233
    %v235 = vextract.high.u32 %v233
    %v236 = vmul.u32 %v229, %v220
    %v237 = vadd.s32 %v232, %v234
    %vm238 = vc.u32 %v232, %v234
    %v239 = vadd.s32 %v235, 1
    %v240 = vsel %vm238, %v239, %v235
    %v241 = vadd.s32 %v236, %v240
    %v242 = vadd.s32 %v241, 536870912
    %v243 = vshrl.u32 %v242, 30
    %v244 = vshll.u32 %v243, 30
    %v245 = vsub.s32 %v241, %v244
    %vm246 = vcmp.lt.s32.totalorder %v245, 0
    %v247 = vsub.s32 0, %v245
    %v248 = vsel %vm246, %v247, %v245
    %v249 = vclz %v248
    %v250 = vsub.s32 %v249, 2
    %vm251 = vcmp.gt.s32.totalorder 0, %v250
    %v252 = vsel %vm251, 0, %v250
    %v253 = vsub.s32 32, %v252
    %v254 = vshll.u32 %v245, %v252
    %v255 = vshrl.u32 %v237, %v253
    %v256 = vor.u32 %v254, %v255
    %v257 = vsub.s32 4294967266, %v252
    %v258 = vadd.s32 %v257, 127
    %v259 = vshll.u32 %v258, 23
    %v260 = vor.u32 4788187, %v259
    %v261 = vand.u32 2147483647, %v260
    %v263 = vcvt.s32.f32 %v256
    %v264 = vmul.f32 %v263, %v261
    %v265 = vxor.u32 %v264, 2147483648
    %v266 = vsel %vm183, %v265, %v264
    %v267 = vsub.s32 4, %v243
    %v268 = vsel %vm183, %v267, %v243
    %v269 = vsel %vm182, %v76, %v266
    %v270 = vsel %vm182, 0, %v268
    %v271 = vcosq.f32.pop %v269
    %v272 = vsinq.f32.pop %v269
    %vm273 = vweird.f32 %v76
    %v274 = vadd.s32 %v270, 3
    %v275 = vand.u32 %v274, 3
    %vm276 = vcmp.lt.s32.totalorder %v275, 2
    %vm277 = vcmp.eq.s32.totalorder %v275, 0
    %v278 = vxor.u32 %v272, 2147483648
    %v279 = vsel %vm277, %v271, %v278
    %vm280 = vcmp.eq.s32.totalorder %v275, 2
    %v281 = vxor.u32 %v271, 2147483648
    %v282 = vsel %vm280, %v281, %v272
    %v283 = vsel %vm276, %v279, %v282
    %v284 = vsel %vm273, nan, %v283
    %v285 = vmul.f32 %v75, %v284
    %v286 = vld [vmem:[#allocation3] sm:$0xff]
    %v287 = vmul.f32 %v180, 0.1
    %v288 = vadd.f32 %v286, %v287
    %289 = vst [vmem:[#allocation6] sm:$0xff] %v288
    %v290 = vld [vmem:[#allocation3 + $0x8] sm:$0xff]
    %v291 = vmul.f32 %v285, 0.1
    %v292 = vadd.f32 %v290, %v291
    %293 = vst [vmem:[#allocation6 + $0x8] sm:$0xff] %v292
    // Predicated region
    $region14: #{tpu_custom_call.1} parent=1 // pred_check
      _
    $region15: #{tpu_custom_call.1} parent=1 // pred_check_branch
      %295 = sbr.rel (0) target = $region17
    $region16: #{tpu_custom_call.1} parent=1 // pred_region
      %s297 = ssub.s32 256, 256
      %298 = vsyncadd [#allocation5], %s297
      %s299 = sshll.u32 [#allocation6], 4
      %s300 = int_to_ptr.vmem [resolvable:$true] %s299
      %305 = dma.vmem_to_hbm [thread:$0]  %s300, 256, %s2, [#allocation5], 128, 128, 8
    $region17: #{tpu_custom_call.1} parent=1 // pred_fallthru
      _
    // Predicated region
    $region18: #{tpu_custom_call.1} parent=1 // pred_check
      _
    $region19: #{tpu_custom_call.1} parent=1 // pred_check_branch
      %307 = sbr.rel (0) target = $region21
    $region20: #{tpu_custom_call.1} parent=1 // pred_region
      %308 = dma.done [#allocation5], 256
    $region21: #{tpu_custom_call.1} parent=1 // pred_fallthru
      _
    %309 = vsyncpa [#allocation4], 1
    %310 = vsyncpa [#allocation5], 1

</llo_original>
